<compile_context>
chip_gen: v7x
topology: tpu7x:2x2x1
jax: 0.10.0
libtpu: 0.0.40
codegen_flags: <defaults>
</compile_context>

<pallas_src>
import math
from typing import NamedTuple, Optional

import jax
import jax.numpy as jnp
from jax.experimental import pallas as pl
from jax.experimental.pallas import tpu as pltpu

_LANE = 128
_MIB = 1024 * 1024


# ----------------------------- small helpers ---------------------------------

def _round_up(a: int, b: int) -> int:
    return (a + b - 1) // b * b


def _sublane_multiple(dtype) -> int:
    # f32 -> 8 rows/vreg, bf16 -> 16, (fp8 would be 32)
    itemsize = jnp.dtype(dtype).itemsize
    return 8 * max(1, 4 // itemsize)


def _device_kind() -> str:
    try:
        return jax.devices()[0].device_kind.lower()
    except Exception:
        return ""


def _chip_generation() -> str:
    kind = _device_kind()
    for g in ("v5", "v6", "v7"):
        if g in kind:
            return g
    return "v6"


def _tpu_vmem_bytes() -> int:
    try:
        v = int(getattr(pltpu.get_tpu_info(), "vmem_capacity_bytes", 0))
        if v > 0:
            return v
    except Exception:
        pass
    # conservative fallbacks if the query is unavailable
    return 64 * _MIB if _chip_generation() == "v7" else 128 * _MIB


def _pad_dim(d: int, prefer256: bool) -> int:
    p = _round_up(d, _LANE)
    if prefer256 and p > _LANE and p % 256:
        p = _round_up(p, 256)   # avoid half-utilized 128-wide trailing MXU panel
    return p


def _maybe_pad2(a, rows: int, cols: int):
    pr, pc = rows - a.shape[0], cols - a.shape[1]
    if pr or pc:
        a = jnp.pad(a, ((0, pr), (0, pc)))
    return a


# ----------------------------- VMEM estimates --------------------------------

def _resident_est(tm, d_model_p, d_ff_p, cbytes, obytes):
    est = 2 * d_model_p * d_ff_p * cbytes          # resident W1 + W2 (single buffer)
    est += (d_ff_p + d_model_p) * 4                # biases (f32)
    est += 2 * tm * d_model_p * cbytes             # double-buffered x tiles
    est += 2 * tm * d_model_p * obytes             # double-buffered out tiles
    est += tm * d_ff_p * (4 + cbytes)              # f32 h + cast copy
    est += tm * d_model_p * 4                      # f32 second-matmul result
    return est


def _streamed_est(tm, tf, d_model_p, cbytes, obytes, wbuf):
    est = 2 * tm * d_model_p * cbytes              # x tiles
    est += 2 * tm * d_model_p * obytes             # out tiles
    est += 2 * wbuf * d_model_p * tf * cbytes      # W1 + W2 blocks (wbuf-deep)
    est += 2 * tf * 4 + d_model_p * 4              # biases
    est += tm * d_model_p * 4                      # f32 accumulator scratch
    est += tm * tf * (4 + cbytes)                  # f32 h + cast copy
    est += tm * d_model_p * 4                      # partial second-matmul result
    return est


# ----------------------------- geometry / params -----------------------------

class FFNGeometry(NamedTuple):
    compute_dtype: object
    d_model_p: int
    d_ff_p: int
    streamed: bool
    tf: int                # 0 when resident
    tm_hint: int
    weight_buffers: int    # pipeline depth for streamed W1/W2 blocks
    vmem_cap: int          # physical VMEM minus headroom


class FFNParams(NamedTuple):
    w1: jax.Array          # (d_model_p, d_ff_p)  compute_dtype
    b1: jax.Array          # (1, d_ff_p)          f32
    w2: jax.Array          # (d_ff_p, d_model_p)  compute_dtype
    b2: jax.Array          # (1, d_model_p)       f32
    d_model: int
    d_ff: int
    geom: FFNGeometry


def _ffn_geometry(d_model, d_ff, compute_dtype=jnp.bfloat16, *,
                  tm: Optional[int] = None, tf: Optional[int] = None) -> FFNGeometry:
    gen = _chip_generation()
    vmem = _tpu_vmem_bytes()
    cbytes = jnp.dtype(compute_dtype).itemsize
    obytes = 4                                     # conservative (actual at call time)
    sub_mult = _sublane_multiple(compute_dtype)
    prefer256 = gen != "v5"                        # v6e/v7x MXUs are 256-wide
    lane_step = 256 if prefer256 else _LANE

    d_model_p = _pad_dim(d_model, prefer256)
    d_ff_aligned = _pad_dim(d_ff, prefer256)

    if vmem <= 80 * _MIB:                          # v7x-like: 64 MiB VMEM per core
        resident_budget = int(vmem * 0.45)
        vmem_cap = vmem - 8 * _MIB
        tm_stream_default = 512
    else:                                          # v5e / v6e: 128 MiB VMEM
        resident_budget = int(vmem * 0.70)
        vmem_cap = vmem - 16 * _MIB
        tm_stream_default = 1024 if gen == "v6" else 512
    tm_resident_default = 512
    vmem_target = int(vmem_cap * 0.95)

    force_streamed = tf is not None
    resident_w_bytes = 2 * d_model_p * d_ff_aligned * cbytes
    streamed = force_streamed or resident_w_bytes > resident_budget

    if not streamed:
        tm_r = _round_up(tm if tm is not None else tm_resident_default, sub_mult)
        if tm is None:
            while tm_r > sub_mult and _resident_est(
                    tm_r, d_model_p, d_ff_aligned, cbytes, obytes) > vmem_target:
                tm_r = max(sub_mult, _round_up(tm_r // 2, sub_mult))
        if tm is not None or _resident_est(
                tm_r, d_model_p, d_ff_aligned, cbytes, obytes) <= vmem_target:
            return FFNGeometry(compute_dtype, d_model_p, d_ff_aligned,
                               False, 0, tm_r, 2, vmem_cap)
        streamed = True                            # cannot fit resident even at tiny tm

    # ---- streamed (d_ff blocked) ----
    wbuf = 3 if gen == "v5" else 2                 # deeper weight buffering helps v5e
    tm_s = _round_up(tm if tm is not None else tm_stream_default, sub_mult)

    if tf is not None:
        tf_s = _round_up(max(int(tf), _LANE), _LANE)
    else:
        def _fit_tf(tm_):
            tf_try = _round_up(d_ff_aligned, lane_step)
            while tf_try > lane_step and _streamed_est(
                    tm_, tf_try, d_model_p, cbytes, obytes, wbuf) > vmem_target:
                tf_try -= lane_step
            if _streamed_est(tm_, tf_try, d_model_p, cbytes, obytes, wbuf) <= vmem_target:
                return tf_try
            return None

        tf_s = _fit_tf(tm_s)
        while tf_s is None and tm is None and tm_s > sub_mult:
            tm_s = max(sub_mult, _round_up(tm_s // 2, sub_mult))
            tf_s = _fit_tf(tm_s)
        if tf_s is None:
            tf_s = lane_step

    d_ff_p = _round_up(d_ff, tf_s)
    if d_ff_p // tf_s < wbuf:
        wbuf = 2
    return FFNGeometry(compute_dtype, d_model_p, d_ff_p, True, tf_s, tm_s, wbuf, vmem_cap)


def prepare_params(w1, b1, w2, b2, *, compute_dtype=jnp.bfloat16,
                   tm: Optional[int] = None, tf: Optional[int] = None) -> FFNParams:
    """Pad + cast the FFN weights once (hoisted out of the per-call hot path)."""
    d_model, d_ff = w1.shape
    assert w2.shape == (d_ff, d_model)
    assert b1.shape == (d_ff,) and b2.shape == (d_model,)
    geom = _ffn_geometry(d_model, d_ff, compute_dtype, tm=tm, tf=tf)
    dm, df = geom.d_model_p, geom.d_ff_p
    w1_p = _maybe_pad2(w1.astype(compute_dtype), dm, df)
    w2_p = _maybe_pad2(w2.astype(compute_dtype), df, dm)
    b1_p = _maybe_pad2(b1.astype(jnp.float32).reshape(1, d_ff), 1, df)
    b2_p = _maybe_pad2(b2.astype(jnp.float32).reshape(1, d_model), 1, dm)
    return FFNParams(w1_p, b1_p, w2_p, b2_p, d_model, d_ff, geom)


# ----------------------------- kernels ----------------------------------------

def _ffn_kernel_resident(x_ref, w1_ref, b1_ref, w2_ref, b2_ref, o_ref):
    """One row tile: y = relu(x @ W1 + b1) @ W2 + b2, weights fully VMEM-resident."""
    h = jnp.dot(x_ref[...], w1_ref[...], preferred_element_type=jnp.float32)
    h = jnp.maximum(h + b1_ref[...], 0.0)          # bias + ReLU in f32
    # dropout: identity (eval mode)
    h = h.astype(w2_ref.dtype)                     # matmul operands in compute dtype
    y = jnp.dot(h, w2_ref[...], preferred_element_type=jnp.float32)
    o_ref[...] = (y + b2_ref[...]).astype(o_ref.dtype)


def _ffn_kernel_streamed(x_ref, w1_ref, b1_ref, w2_ref, b2_ref, o_ref, acc_ref):
    """d_ff streamed in blocks; partial second-matmul products accumulate in f32."""
    j = pl.program_id(1)

    @pl.when(j == 0)
    def _init():
        acc_ref[...] = jnp.zeros_like(acc_ref)

    h = jnp.dot(x_ref[...], w1_ref[...], preferred_element_type=jnp.float32)
    h = jnp.maximum(h + b1_ref[...], 0.0)          # bias1 + ReLU per d_ff block
    # dropout: identity (eval mode)
    h = h.astype(w2_ref.dtype)
    acc_ref[...] += jnp.dot(h, w2_ref[...], preferred_element_type=jnp.float32)

    @pl.when(j == pl.num_programs(1) - 1)
    def _finalize():
        o_ref[...] = (acc_ref[...] + b2_ref[...]).astype(o_ref.dtype)


# ----------------------------- wrapper -----------------------------------------

def feed_forward_block(x, w1, b1=None, w2=None, b2=None, *, dropout_p=0.0,
                       training=False, tm=None, tf=None,
                       compute_dtype=jnp.bfloat16):
    """FeedForwardBlock forward: linear_2(dropout(relu(linear_1(x)))).

    x: (B, S, d_model).  `w1` may be either the raw (d_model, d_ff) weight
    (math layout, already transposed vs. PyTorch's (out, in)) together with
    b1/w2/b2, or an FFNParams from prepare_params() (preferred: padding/cast
    hoisted out of the per-call path).
    """
    if training and dropout_p > 0.0:
        # TODO(synk): training-mode stochastic dropout not implemented.
        raise NotImplementedError("only eval-mode (identity) dropout is supported")

    if isinstance(w1, FFNParams):
        params = w1
    else:
        assert b1 is not None and w2 is not None and b2 is not None
        params = prepare_params(w1, b1, w2, b2, compute_dtype=compute_dtype,
                                tm=tm, tf=tf)

    geom = params.geom
    cdt = geom.compute_dtype
    B, S, d_model = x.shape
    assert d_model == params.d_model
    out_dtype = x.dtype
    cbytes = jnp.dtype(cdt).itemsize
    obytes = jnp.dtype(out_dtype).itemsize
    sub_mult = _sublane_multiple(cdt)
    dm, df = geom.d_model_p, geom.d_ff_p

    # --- row tiling (clamped for tiny M, bf16 uses 16-row sublane packing) -----
    M = B * S
    tm_req = tm if tm is not None else geom.tm_hint
    tm_eff = _round_up(min(max(tm_req, sub_mult), _round_up(M, sub_mult)), sub_mult)
    M_p = _round_up(M, tm_eff)

    # --- per-call activation prep (pad/cast only when needed) ------------------
    x2 = x.reshape(M, d_model)
    if x2.dtype != cdt:
        x2 = x2.astype(cdt)
    x2 = _maybe_pad2(x2, M_p, dm)

    # --- grid / specs -----------------------------------------------------------
    if geom.streamed:
        tf_b = geom.tf
        grid = (M_p // tm_eff, df // tf_b)
        wb_mode = pl.Buffered(geom.weight_buffers) if geom.weight_buffers != 2 else None
        in_specs = [
            pl.BlockSpec((tm_eff, dm), lambda i, j: (i, 0)),
            pl.BlockSpec((dm, tf_b), lambda i, j: (0, j), pipeline_mode=wb_mode),
            pl.BlockSpec((1, tf_b), lambda i, j: (0, j)),
            pl.BlockSpec((tf_b, dm), lambda i, j: (j, 0), pipeline_mode=wb_mode),
            pl.BlockSpec((1, dm), lambda i, j: (0, 0), pipeline_mode=pl.Buffered(1)),
        ]
        out_specs = pl.BlockSpec((tm_eff, dm), lambda i, j: (i, 0))
        scratch_shapes = [pltpu.VMEM((tm_eff, dm), jnp.float32)]
        kernel = _ffn_kernel_streamed
        dim_sem = ("parallel", "arbitrary")
        est = _streamed_est(tm_eff, tf_b, dm, cbytes, obytes, geom.weight_buffers)
    else:
        grid = (M_p // tm_eff,)
        resident = pl.Buffered(1)   # constant-index weights: single-buffered, resident
        in_specs = [
            pl.BlockSpec((tm_eff, dm), lambda i: (i, 0)),
            pl.BlockSpec((dm, df), lambda i: (0, 0), pipeline_mode=resident),
            pl.BlockSpec((1, df), lambda i: (0, 0), pipeline_mode=resident),
            pl.BlockSpec((df, dm), lambda i: (0, 0), pipeline_mode=resident),
            pl.BlockSpec((1, dm), lambda i: (0, 0), pipeline_mode=resident),
        ]
        out_specs = pl.BlockSpec((tm_eff, dm), lambda i: (i, 0))
        scratch_shapes = []
        kernel = _ffn_kernel_resident
        dim_sem = ("parallel",)
        est = _resident_est(tm_eff, dm, df, cbytes, obytes)

    # explicit VMEM budget: estimate + margin, never above physical minus headroom
    vmem_limit = int(min(max(int(est * 1.15), 32 * _MIB), geom.vmem_cap))

    out = pl.pallas_call(
        kernel,
        out_shape=jax.ShapeDtypeStruct((M_p, dm), out_dtype),
        grid_spec=pltpu.PrefetchScalarGridSpec(
            num_scalar_prefetch=0,
            grid=grid,
            in_specs=in_specs,
            out_specs=out_specs,
            scratch_shapes=scratch_shapes,
        ),
        compiler_params=pltpu.CompilerParams(
            dimension_semantics=dim_sem,
            vmem_limit_bytes=vmem_limit,
        ),
    )(x2, params.w1, params.b1, params.w2, params.b2)

    return out[:M, :d_model].reshape(B, S, d_model)


# ----------------------------- demo / check ------------------------------------

def init_params(key, d_model, d_ff, dtype=jnp.float32):
    """Deterministic init mimicking nn.Linear default (uniform +-1/sqrt(fan_in))."""
    k1, k2, k3, k4 = jax.random.split(key, 4)
    bound1 = 1.0 / math.sqrt(d_model)
    bound2 = 1.0 / math.sqrt(d_ff)
    w1 = jax.random.uniform(k1, (d_model, d_ff), dtype, -bound1, bound1)
    b1 = jax.random.uniform(k2, (d_ff,), dtype, -bound1, bound1)
    w2 = jax.random.uniform(k3, (d_ff, d_model), dtype, -bound2, bound2)
    b2 = jax.random.uniform(k4, (d_model,), dtype, -bound2, bound2)
    return w1, b1, w2, b2


def _reference(x, w1, b1, w2, b2):
    B, S, d_model = x.shape
    h = jnp.maximum(x.reshape(-1, d_model) @ w1 + b1, 0.0)
    return (h @ w2 + b2).reshape(B, S, d_model)


if __name__ == "__main__":
    key = jax.random.PRNGKey(0)
    B, S, d_model, d_ff = 2, 8, 32, 64
    dropout_p = 0.1  # identity at eval time

    kx, kp = jax.random.split(key)
    x = jax.random.normal(kx, (B, S, d_model), jnp.float32)
    w1, b1, w2, b2 = init_params(kp, d_model, d_ff)
    y_ref = _reference(x, w1, b1, w2, b2)

    # 1) fast path: pre-padded / pre-cast bf16 weights (prepare_params hoists the
    #    per-call pad+cast), resident single-buffered weights, f32 accumulation.
    params_bf16 = prepare_params(w1, b1, w2, b2, compute_dtype=jnp.bfloat16)
    y = jax.block_until_ready(
        feed_forward_block(x, params_bf16, dropout_p=dropout_p))
    assert y.shape == x.shape
    assert jnp.allclose(y, y_ref, atol=5e-2, rtol=5e-2), "bf16 resident path mismatch"

    # 2) raw-weight fallback path with f32 matmul operands -> tight tolerance.
    y32 = jax.block_until_ready(
        feed_forward_block(x, w1, b1, w2, b2, dropout_p=dropout_p,
                           compute_dtype=jnp.float32))
    assert jnp.allclose(y32, y_ref, atol=1e-5, rtol=1e-5), "f32 resident path mismatch"

    # 3) d_ff-streamed variant (large-d_ff / v7x path), forced via tf so the
    #    f32 accumulator takes two grid steps.
    d_ff_big = 256
    w1b, b1b, w2b, b2b = init_params(jax.random.PRNGKey(1), d_model, d_ff_big)
    y_big_ref = _reference(x, w1b, b1b, w2b, b2b)
    params_stream = prepare_params(w1b, b1b, w2b, b2b, tf=128,
                                   compute_dtype=jnp.float32)
    y_big = jax.block_until_ready(feed_forward_block(x, params_stream))
    assert jnp.allclose(y_big, y_big_ref, atol=1e-5, rtol=1e-5), "streamed path mismatch"

    print("KERNEL_OK")
</pallas_src>

<mosaic_0001>
module attributes {stable_mosaic.version = 11 : i64} {
  func.func @_ffn_kernel_resident(%arg0: i32, %arg1: memref<16x128xbf16, #tpu.memory_space<vmem>>, %arg2: memref<128x128xbf16, #tpu.memory_space<vmem>>, %arg3: memref<1x128xf32, #tpu.memory_space<vmem>>, %arg4: memref<128x128xbf16, #tpu.memory_space<vmem>>, %arg5: memref<1x128xf32, #tpu.memory_space<vmem>>, %arg6: memref<16x128xf32, #tpu.memory_space<vmem>>) attributes {dimension_semantics = [#tpu.dimension_semantics<parallel>], iteration_bounds = array<i64: 1>, scalar_prefetch = 0 : i64, scratch_operands = 0 : i64, tpu.core_type = #tpu.core_type<tc>, window_params = [{transform_indices = @transform_0, window_bounds = array<i64: 16, 128>}, {pipeline_mode = #tpu.pipeline_mode<synchronous>, transform_indices = @transform_1, window_bounds = array<i64: 128, 128>}, {pipeline_mode = #tpu.pipeline_mode<synchronous>, transform_indices = @transform_2, window_bounds = array<i64: 1, 128>}, {pipeline_mode = #tpu.pipeline_mode<synchronous>, transform_indices = @transform_3, window_bounds = array<i64: 128, 128>}, {pipeline_mode = #tpu.pipeline_mode<synchronous>, transform_indices = @transform_4, window_bounds = array<i64: 1, 128>}, {transform_indices = @transform_5, window_bounds = array<i64: 16, 128>}]} {
    %c0 = arith.constant 0 : index
    %c0_0 = arith.constant 0 : index
    %0 = vector.load %arg1[%c0, %c0_0] : memref<16x128xbf16, #tpu.memory_space<vmem>>, vector<16x128xbf16>
    %c0_1 = arith.constant 0 : index
    %c0_2 = arith.constant 0 : index
    %1 = vector.load %arg2[%c0_1, %c0_2] : memref<128x128xbf16, #tpu.memory_space<vmem>>, vector<128x128xbf16>
    %cst = arith.constant dense<0.000000e+00> : vector<16x128xf32>
    %2 = tpu.matmul %0, %1, %cst {dimension_numbers = #tpu.dot_dimension_numbers<[1], [0], [0], [1], [0, 0, 1, 1], [], []>} : vector<16x128xbf16>, vector<128x128xbf16>, vector<16x128xf32> -> vector<16x128xf32>
    %c0_3 = arith.constant 0 : index
    %c0_4 = arith.constant 0 : index
    %3 = vector.load %arg3[%c0_3, %c0_4] : memref<1x128xf32, #tpu.memory_space<vmem>>, vector<1x128xf32>
    %4 = vector.broadcast %3 : vector<1x128xf32> to vector<16x128xf32>
    %5 = arith.addf %2, %4 : vector<16x128xf32>
    %cst_5 = arith.constant 0.000000e+00 : f32
    %6 = vector.broadcast %cst_5 : f32 to vector<16x128xf32>
    %7 = arith.maximumf %5, %6 : vector<16x128xf32>
    %8 = arith.truncf %7 : vector<16x128xf32> to vector<16x128xbf16>
    %c0_6 = arith.constant 0 : index
    %c0_7 = arith.constant 0 : index
    %9 = vector.load %arg4[%c0_6, %c0_7] : memref<128x128xbf16, #tpu.memory_space<vmem>>, vector<128x128xbf16>
    %cst_8 = arith.constant dense<0.000000e+00> : vector<16x128xf32>
    %10 = tpu.matmul %8, %9, %cst_8 {dimension_numbers = #tpu.dot_dimension_numbers<[1], [0], [0], [1], [0, 0, 1, 1], [], []>} : vector<16x128xbf16>, vector<128x128xbf16>, vector<16x128xf32> -> vector<16x128xf32>
    %c0_9 = arith.constant 0 : index
    %c0_10 = arith.constant 0 : index
    %11 = vector.load %arg5[%c0_9, %c0_10] : memref<1x128xf32, #tpu.memory_space<vmem>>, vector<1x128xf32>
    %12 = vector.broadcast %11 : vector<1x128xf32> to vector<16x128xf32>
    %13 = arith.addf %10, %12 : vector<16x128xf32>
    %c0_11 = arith.constant 0 : index
    %c0_12 = arith.constant 0 : index
    %14 = vector.load %arg6[%c0_11, %c0_12] : memref<16x128xf32, #tpu.memory_space<vmem>>, vector<16x128xf32>
    tpu.vector_store %arg6[%c0_11, %c0_12], %13 {strides = array<i32>} : memref<16x128xf32, #tpu.memory_space<vmem>>, vector<16x128xf32>,
    return
  }
  func.func @transform_0(%arg0: i32) -> (i32, i32) {
    %c0_i32 = arith.constant 0 : i32
    %c0_i32_0 = arith.constant 0 : i32
    return %arg0, %c0_i32 : i32, i32
  }
  func.func @transform_1(%arg0: i32) -> (i32, i32) {
    %c0_i32 = arith.constant 0 : i32
    %c0_i32_0 = arith.constant 0 : i32
    %c0_i32_1 = arith.constant 0 : i32
    return %c0_i32, %c0_i32_0 : i32, i32
  }
  func.func @transform_2(%arg0: i32) -> (i32, i32) {
    %c0_i32 = arith.constant 0 : i32
    %c0_i32_0 = arith.constant 0 : i32
    %c0_i32_1 = arith.constant 0 : i32
    return %c0_i32, %c0_i32_0 : i32, i32
  }
  func.func @transform_3(%arg0: i32) -> (i32, i32) {
    %c0_i32 = arith.constant 0 : i32
    %c0_i32_0 = arith.constant 0 : i32
    %c0_i32_1 = arith.constant 0 : i32
    return %c0_i32, %c0_i32_0 : i32, i32
  }
  func.func @transform_4(%arg0: i32) -> (i32, i32) {
    %c0_i32 = arith.constant 0 : i32
    %c0_i32_0 = arith.constant 0 : i32
    %c0_i32_1 = arith.constant 0 : i32
    return %c0_i32, %c0_i32_0 : i32, i32
  }
  func.func @transform_5(%arg0: i32) -> (i32, i32) {
    %c0_i32 = arith.constant 0 : i32
    %c0_i32_0 = arith.constant 0 : i32
    return %arg0, %c0_i32 : i32, i32
  }
}

</mosaic_0001>

<llo_original>
// kernel: tpu_custom_call.1
$region0: #{tpu_custom_call.1}
  #allocation0 [shape = 'u32[]', space=smem, size = 0x4, offset = 0x4, fixed_abs, tag = 'smem constant byte address 0x4 - core index']
  #allocation1 [shape = 'u32[144,128]{1,0:T(1,128)}', space=vmem, size = 0x12000, scoped, tag = 'internal scratch']
  %s0 = inlined_call_operand.hbm [shape: bf16[16,128], index: 0, kind: input, shape index: {}]
  %s1 = inlined_call_operand.hbm [shape: bf16[128,128], index: 1, kind: input, shape index: {}]
  %s2 = inlined_call_operand.vmem [shape: f32[1,128], index: 2, kind: input, shape index: {}]
  %s3 = inlined_call_operand.hbm [shape: bf16[128,128], index: 3, kind: input, shape index: {}]
  %s4 = inlined_call_operand.vmem [shape: f32[1,128], index: 4, kind: input, shape index: {}]
  %s5 = inlined_call_operand.hbm [shape: f32[16,128], index: 5, kind: output, shape index: {}]
  %s6 = sld [smem:[#allocation0]]
  $region42: #{tpu_custom_call.1} parent=0
    _
  %s8 = ssub.s32 1, %s6
  %s9 = scalar_select 0, %s8, %s6
  $region1: #{tpu_custom_call.1} parent=0
    #allocation2 [shape = 'u8[4096]{0}', space=vmem, size = 0x1000, scoped, tag = 'input window, operand 0, single buffered']
    #allocation3 [shape = 's32[1]{0}', space=sflag, size = 0x4, scoped, tag = 'scoped memory for tpu_custom_call.1']
    #allocation4 [shape = 's32[1]{0}', space=sflag, size = 0x4, scoped, tag = 'scoped memory for tpu_custom_call.1']
    #allocation5 [shape = 'u8[32768]{0}', space=vmem, size = 0x8000, scoped, tag = 'input window, operand 1, single buffered']
    #allocation6 [shape = 's32[1]{0}', space=sflag, size = 0x4, scoped, tag = 'scoped memory for tpu_custom_call.1']
    #allocation7 [shape = 'u8[32768]{0}', space=vmem, size = 0x8000, scoped, tag = 'input window, operand 3, single buffered']
    #allocation8 [shape = 'u8[8192]{0}', space=vmem, size = 0x2000, scoped, tag = 'output window, operand 0, single buffered']
    %10 = vsyncpa [#allocation3], 0
    %11 = vsyncpa [#allocation6], 0
    %12 = vsyncpa [#allocation4], 0
    // Predicated region
    $region2: #{tpu_custom_call.1} parent=1 // pred_check
      _
    $region3: #{tpu_custom_call.1} parent=1 // pred_check_branch
      %14 = sbr.rel (0) target = $region5
    $region4: #{tpu_custom_call.1} parent=1 // pred_region
      %s16 = ssub.s32 128, 128
      %17 = vsyncadd [#allocation3], %s16
      %s18 = sshll.u32 [#allocation2], 4
      %s19 = int_to_ptr.vmem [resolvable:$true] %s18
      %24 = dma.hbm_to_vmem [thread:$0]  %s0, 128, %s19, [#allocation3], 64, 64, 4
    $region5: #{tpu_custom_call.1} parent=1 // pred_fallthru
      _
    // Predicated region
    $region6: #{tpu_custom_call.1} parent=1 // pred_check
      _
    $region7: #{tpu_custom_call.1} parent=1 // pred_check_branch
      %26 = sbr.rel (0) target = $region9
    $region8: #{tpu_custom_call.1} parent=1 // pred_region
      %s28 = ssub.s32 1024, 1024
      %29 = vsyncadd [#allocation6], %s28
      %s30 = sshll.u32 [#allocation5], 4
      %s31 = int_to_ptr.vmem [resolvable:$true] %s30
      %36 = dma.hbm_to_vmem [thread:$0]  %s1, 1024, %s31, [#allocation6], 64, 64, 4
    $region9: #{tpu_custom_call.1} parent=1 // pred_fallthru
      _
    // Predicated region
    $region10: #{tpu_custom_call.1} parent=1 // pred_check
      _
    $region11: #{tpu_custom_call.1} parent=1 // pred_check_branch
      %38 = sbr.rel (0) target = $region13
    $region12: #{tpu_custom_call.1} parent=1 // pred_region
      _
    $region13: #{tpu_custom_call.1} parent=1 // pred_fallthru
      _
    // Predicated region
    $region14: #{tpu_custom_call.1} parent=1 // pred_check
      _
    $region15: #{tpu_custom_call.1} parent=1 // pred_check_branch
      %40 = sbr.rel (0) target = $region17
    $region16: #{tpu_custom_call.1} parent=1 // pred_region
      %s42 = ssub.s32 1024, 1024
      %43 = vsyncadd [#allocation6], %s42
      %s44 = sshll.u32 [#allocation7], 4
      %s45 = int_to_ptr.vmem [resolvable:$true] %s44
      %50 = dma.hbm_to_vmem [thread:$0]  %s3, 1024, %s45, [#allocation6], 64, 64, 4
    $region17: #{tpu_custom_call.1} parent=1 // pred_fallthru
      _
    // Predicated region
    $region18: #{tpu_custom_call.1} parent=1 // pred_check
      _
    $region19: #{tpu_custom_call.1} parent=1 // pred_check_branch
      %52 = sbr.rel (0) target = $region21
    $region20: #{tpu_custom_call.1} parent=1 // pred_region
      _
    $region21: #{tpu_custom_call.1} parent=1 // pred_fallthru
      _
    // Predicated region
    $region22: #{tpu_custom_call.1} parent=1 // pred_check
      _
    $region23: #{tpu_custom_call.1} parent=1 // pred_check_branch
      %54 = sbr.rel (0) target = $region25
    $region24: #{tpu_custom_call.1} parent=1 // pred_region
      %55 = dma.done [#allocation3], 128
    $region25: #{tpu_custom_call.1} parent=1 // pred_fallthru
      _
    // Predicated region
    $region26: #{tpu_custom_call.1} parent=1 // pred_check
      _
    $region27: #{tpu_custom_call.1} parent=1 // pred_check_branch
      %57 = sbr.rel (0) target = $region29
    $region28: #{tpu_custom_call.1} parent=1 // pred_region
      %58 = dma.done [#allocation6], 1024
    $region29: #{tpu_custom_call.1} parent=1 // pred_fallthru
      _
    // Predicated region
    $region30: #{tpu_custom_call.1} parent=1 // pred_check
      _
    $region31: #{tpu_custom_call.1} parent=1 // pred_check_branch
      %60 = sbr.rel (0) target = $region33
    $region32: #{tpu_custom_call.1} parent=1 // pred_region
      %61 = dma.done [#allocation6], 1024
    $region33: #{tpu_custom_call.1} parent=1 // pred_fallthru
      _
    %v63 = vld [vmem:[#allocation2] sm:$0xf]
    %v64 = vld [vmem:[#allocation2 + $0x4] sm:$0xf]
    %v65 = vld [vmem:[#allocation5] sm:$0xf]
    %v66 = vld [vmem:[#allocation5 + $0x4] sm:$0xf]
    %v67 = vld [vmem:[#allocation5 + $0x8] sm:$0xf]
    %v68 = vld [vmem:[#allocation5 + $0xc] sm:$0xf]
    %v69 = vld [vmem:[#allocation5 + $0x10] sm:$0xf]
    %v70 = vld [vmem:[#allocation5 + $0x14] sm:$0xf]
    %v71 = vld [vmem:[#allocation5 + $0x18] sm:$0xf]
    %v72 = vld [vmem:[#allocation5 + $0x1c] sm:$0xf]
    %v73 = vld [vmem:[#allocation5 + $0x20] sm:$0xf]
    %v74 = vld [vmem:[#allocation5 + $0x24] sm:$0xf]
    %v75 = vld [vmem:[#allocation5 + $0x28] sm:$0xf]
    %v76 = vld [vmem:[#allocation5 + $0x2c] sm:$0xf]
    %v77 = vld [vmem:[#allocation5 + $0x30] sm:$0xf]
    %v78 = vld [vmem:[#allocation5 + $0x34] sm:$0xf]
    %v79 = vld [vmem:[#allocation5 + $0x38] sm:$0xf]
    %v80 = vld [vmem:[#allocation5 + $0x3c] sm:$0xf]
    %v81 = vld [vmem:[%s2] sm:$0x1]
    %v83 = vlaneseq
    %v84 = vshrl.u32 %v83, 7
    %v85 = vsub.s32 0, %v84
    %v86 = vrot.slane %v81, %v85
    %v90 = vunpack.c.l.b16 %v63
    %v91 = vunpack.c.l.b16 %v64
    %v92 = vpack.c.b16 %v91, %v90
    %v110 = vunpack.c.l.b16 %v65
    %v111 = vunpack.c.l.b16 %v66
    %v112 = vunpack.c.l.b16 %v67
    %v113 = vunpack.c.l.b16 %v68
    %v114 = vunpack.c.l.b16 %v69
    %v115 = vunpack.c.l.b16 %v70
    %v116 = vunpack.c.l.b16 %v71
    %v117 = vunpack.c.l.b16 %v72
    %v118 = vunpack.c.l.b16 %v73
    %v119 = vunpack.c.l.b16 %v74
    %v120 = vunpack.c.l.b16 %v75
    %v121 = vunpack.c.l.b16 %v76
    %v122 = vunpack.c.l.b16 %v77
    %v123 = vunpack.c.l.b16 %v78
    %v124 = vunpack.c.l.b16 %v79
    %v125 = vunpack.c.l.b16 %v80
    %v126 = vpack.c.b16 %v111, %v110
    %v127 = vpack.c.b16 %v113, %v112
    %v128 = vpack.c.b16 %v115, %v114
    %v129 = vpack.c.b16 %v117, %v116
    %v130 = vpack.c.b16 %v119, %v118
    %v131 = vpack.c.b16 %v121, %v120
    %v132 = vpack.c.b16 %v123, %v122
    %v133 = vpack.c.b16 %v125, %v124
    %142 = vmatprep.subr.bf16.mxu0 0
    %143 = vmatpush1.bf16.msra.mxu0 %v126
    %144 = vmatprep.subr.bf16.mxu0 0
    %145 = vmatpush1.bf16.msra.mxu0 %v127
    %146 = vmatprep.subr.bf16.mxu0 0
    %147 = vmatpush1.bf16.msra.mxu0 %v128
    %148 = vmatprep.subr.bf16.mxu0 0
    %149 = vmatpush1.bf16.msra.mxu0 %v129
    %150 = vmatprep.subr.bf16.mxu0 0
    %151 = vmatpush1.bf16.msra.mxu0 %v130
    %152 = vmatprep.subr.bf16.mxu0 0
    %153 = vmatpush1.bf16.msra.mxu0 %v131
    %154 = vmatprep.subr.bf16.mxu0 0
    %155 = vmatpush1.bf16.msra.mxu0 %v132
    %156 = vmatprep.subr.bf16.mxu0 0
    %157 = vmatpush1.bf16.msra.mxu0 %v133
    %158 = vmatprep.subr.bf16.mxu0 0
    %159 = vmatpush1.bf16.msra.mxu0 0
    %160 = vmatprep.subr.bf16.mxu0 0
    %161 = vmatpush1.bf16.msra.mxu0 0
    %162 = vmatprep.subr.bf16.mxu0 0
    %163 = vmatpush1.bf16.msra.mxu0 0
    %164 = vmatprep.subr.bf16.mxu0 0
    %165 = vmatpush1.bf16.msra.mxu0 0
    %166 = vmatprep.subr.bf16.mxu0 0
    %167 = vmatpush1.bf16.msra.mxu0 0
    %168 = vmatprep.subr.bf16.mxu0 0
    %169 = vmatpush1.bf16.msra.mxu0 0
    %170 = vmatprep.subr.bf16.mxu0 0
    %171 = vmatpush1.bf16.msra.mxu0 0
    %172 = vmatprep.subr.bf16.mxu0 0
    %173 = vmatpush1.bf16.msra.mxu0 0
    %174 = vmatprep.mubr.bf16.mxu0 0
    %175 = vmatmul.mubr.bf16.gmra.mrb[0].mxu0 %v92
    %v176 = vpop.f32.mrb[0].mxu0
    %v177 = vadd.f32 %v86, %v176
    %v178 = vpop.f32.mrb[0].mxu0
    %v179 = vpop.f32.mrb[0].mxu0
    %v180 = vadd.f32 %v86, %v179
    %v181 = vpop.f32.mrb[0].mxu0
    %182 = vdwg.mxu0
    %v183 = vmax.f32 %v177, 0.0
    %v184 = vmax.f32 %v180, 0.0
    %v185 = vpack.c.bf16 %v184, %v183
    %v186 = vld [vmem:[#allocation7] sm:$0xf]
    %v187 = vld [vmem:[#allocation7 + $0x4] sm:$0xf]
    %v188 = vld [vmem:[#allocation7 + $0x8] sm:$0xf]
    %v189 = vld [vmem:[#allocation7 + $0xc] sm:$0xf]
    %v190 = vld [vmem:[#allocation7 + $0x10] sm:$0xf]
    %v191 = vld [vmem:[#allocation7 + $0x14] sm:$0xf]
    %v192 = vld [vmem:[#allocation7 + $0x18] sm:$0xf]
    %v193 = vld [vmem:[#allocation7 + $0x1c] sm:$0xf]
    %v194 = vld [vmem:[#allocation7 + $0x20] sm:$0xf]
    %v195 = vld [vmem:[#allocation7 + $0x24] sm:$0xf]
    %v196 = vld [vmem:[#allocation7 + $0x28] sm:$0xf]
    %v197 = vld [vmem:[#allocation7 + $0x2c] sm:$0xf]
    %v198 = vld [vmem:[#allocation7 + $0x30] sm:$0xf]
    %v199 = vld [vmem:[#allocation7 + $0x34] sm:$0xf]
    %v200 = vld [vmem:[#allocation7 + $0x38] sm:$0xf]
    %v201 = vld [vmem:[#allocation7 + $0x3c] sm:$0xf]
    %v202 = vld [vmem:[%s4] sm:$0x1]
    %v204 = vlaneseq
    %v205 = vshrl.u32 %v204, 7
    %v206 = vsub.s32 0, %v205
    %v207 = vrot.slane %v202, %v206
    %v225 = vunpack.c.l.b16 %v186
    %v226 = vunpack.c.l.b16 %v187
    %v227 = vunpack.c.l.b16 %v188
    %v228 = vunpack.c.l.b16 %v189
    %v229 = vunpack.c.l.b16 %v190
    %v230 = vunpack.c.l.b16 %v191
    %v231 = vunpack.c.l.b16 %v192
    %v232 = vunpack.c.l.b16 %v193
    %v233 = vunpack.c.l.b16 %v194
    %v234 = vunpack.c.l.b16 %v195
    %v235 = vunpack.c.l.b16 %v196
    %v236 = vunpack.c.l.b16 %v197
    %v237 = vunpack.c.l.b16 %v198
    %v238 = vunpack.c.l.b16 %v199
    %v239 = vunpack.c.l.b16 %v200
    %v240 = vunpack.c.l.b16 %v201
    %v241 = vpack.c.b16 %v226, %v225
    %v242 = vpack.c.b16 %v228, %v227
    %v243 = vpack.c.b16 %v230, %v229
    %v244 = vpack.c.b16 %v232, %v231
    %v245 = vpack.c.b16 %v234, %v233
    %v246 = vpack.c.b16 %v236, %v235
    %v247 = vpack.c.b16 %v238, %v237
    %v248 = vpack.c.b16 %v240, %v239
    %257 = vmatprep.subr.bf16.mxu0 0
    %258 = vmatpush1.bf16.msra.mxu0 %v241
    %259 = vmatprep.subr.bf16.mxu0 0
    %260 = vmatpush1.bf16.msra.mxu0 %v242
    %261 = vmatprep.subr.bf16.mxu0 0
    %262 = vmatpush1.bf16.msra.mxu0 %v243
    %263 = vmatprep.subr.bf16.mxu0 0
    %264 = vmatpush1.bf16.msra.mxu0 %v244
    %265 = vmatprep.subr.bf16.mxu0 0
    %266 = vmatpush1.bf16.msra.mxu0 %v245
    %267 = vmatprep.subr.bf16.mxu0 0
    %268 = vmatpush1.bf16.msra.mxu0 %v246
    %269 = vmatprep.subr.bf16.mxu0 0
    %270 = vmatpush1.bf16.msra.mxu0 %v247
    %271 = vmatprep.subr.bf16.mxu0 0
    %272 = vmatpush1.bf16.msra.mxu0 %v248
    %273 = vmatprep.subr.bf16.mxu0 0
    %274 = vmatpush1.bf16.msra.mxu0 0
    %275 = vmatprep.subr.bf16.mxu0 0
    %276 = vmatpush1.bf16.msra.mxu0 0
    %277 = vmatprep.subr.bf16.mxu0 0
    %278 = vmatpush1.bf16.msra.mxu0 0
    %279 = vmatprep.subr.bf16.mxu0 0
    %280 = vmatpush1.bf16.msra.mxu0 0
    %281 = vmatprep.subr.bf16.mxu0 0
    %282 = vmatpush1.bf16.msra.mxu0 0
    %283 = vmatprep.subr.bf16.mxu0 0
    %284 = vmatpush1.bf16.msra.mxu0 0
    %285 = vmatprep.subr.bf16.mxu0 0
    %286 = vmatpush1.bf16.msra.mxu0 0
    %287 = vmatprep.subr.bf16.mxu0 0
    %288 = vmatpush1.bf16.msra.mxu0 0
    %289 = vmatprep.mubr.bf16.mxu0 0
    %290 = vmatmul.mubr.bf16.gmra.mrb[0].mxu0 %v185
    %v291 = vpop.f32.mrb[0].mxu0
    %v292 = vadd.f32 %v207, %v291
    %v293 = vpop.f32.mrb[0].mxu0
    %v294 = vpop.f32.mrb[0].mxu0
    %v295 = vadd.f32 %v207, %v294
    %v296 = vpop.f32.mrb[0].mxu0
    %297 = vdwg.mxu0
    %298 = vst [vmem:[#allocation8] sm:$0xff] %v292
    %299 = vst [vmem:[#allocation8 + $0x8] sm:$0xff] %v295
    // Predicated region
    $region34: #{tpu_custom_call.1} parent=1 // pred_check
      _
    $region35: #{tpu_custom_call.1} parent=1 // pred_check_branch
      %301 = sbr.rel (0) target = $region37
    $region36: #{tpu_custom_call.1} parent=1 // pred_region
      %s303 = ssub.s32 256, 256
      %304 = vsyncadd [#allocation4], %s303
      %s305 = sshll.u32 [#allocation8], 4
      %s306 = int_to_ptr.vmem [resolvable:$true] %s305
      %311 = dma.vmem_to_hbm [thread:$0]  %s306, 256, %s5, [#allocation4], 128, 128, 8
    $region37: #{tpu_custom_call.1} parent=1 // pred_fallthru
      _
    // Predicated region
    $region38: #{tpu_custom_call.1} parent=1 // pred_check
      _
    $region39: #{tpu_custom_call.1} parent=1 // pred_check_branch
      %313 = sbr.rel (0) target = $region41
    $region40: #{tpu_custom_call.1} parent=1 // pred_region
      %314 = dma.done [#allocation4], 256
    $region41: #{tpu_custom_call.1} parent=1 // pred_fallthru
      _
    %315 = vsyncpa [#allocation3], 1
    %316 = vsyncpa [#allocation6], 1
    %317 = vsyncpa [#allocation4], 1

</llo_original>
